<compile_context>
chip_gen: v7x
topology: tpu7x:2x2x1
jax: 0.10.0
libtpu: 0.0.40
codegen_flags: <defaults>
</compile_context>

<pallas_src>
import jax
import jax.numpy as jnp
from jax import lax
from jax.experimental import pallas as pl
from jax.experimental.pallas import tpu as pltpu

MAX_STATE_DIM = 6


def _round_up(x, m):
    return ((x + m - 1) // m) * m


def _mlp_value_kernel(x_ref, w1_ref, b1_ref, w2_ref, b2_ref, w3c_ref, b3_ref, o_ref):
    """One batch tile of the value MLP; batch on the lane axis throughout."""
    cdt = w1_ref.dtype
    # Layer 1: contract the feature axis (axis 1) of both operands == W1 @ x.T.
    # Batch lands on lanes; no transpose of x is materialized.
    h1 = lax.dot_general(
        w1_ref[...], x_ref[...],
        dimension_numbers=(((1,), (1,)), ((), ())),
        preferred_element_type=jnp.float32)                       # [H, bt] f32
    h1 = jnp.maximum(h1 + b1_ref[...], 0.0)
    # Layer 2: [H,H] @ [H,bt] on the MXU, f32 accumulation.
    h2 = jnp.dot(w2_ref[...], h1.astype(cdt),
                 preferred_element_type=jnp.float32)              # [H, bt] f32
    h2 = jnp.maximum(h2 + b2_ref[...], 0.0)
    # Layer 3 (out_features == 1): VPU broadcast-multiply + sublane (XLU)
    # reduction instead of an M=1 MXU matmul.
    out = jnp.sum(w3c_ref[...] * h2, axis=0, keepdims=True) + b3_ref[0, 0]
    o_ref[...] = out.astype(o_ref.dtype)                          # [1, bt]


def _reference(x, params):
    """Plain fused-XLA forward (also the small-batch fallback)."""
    w1, b1, w2, b2, w3, b3 = params
    h1 = jnp.maximum(x @ w1.T + b1, 0.0)
    h2 = jnp.maximum(h1 @ w2.T + b2, 0.0)
    return h2 @ w3.T + b3


def unified_value_network(x, params, *, batch_tile=4096, min_pallas_batch=1024,
                          compute_dtype=jnp.bfloat16, single_buffer_weights=False):
    """x: [B, 6] (or [6]) float32. Returns [B, 1] (or [1]) float32.

    params: (w1[H,6], b1[H], w2[H,H], b2[H], w3[1,H], b3[1]) -- torch Linear layout.
    batch_tile: batch rows per grid step (rounded to a multiple of 128). Primary
      tuning knob; large tiles amortize the ~0.35us per-step pipeline overhead.
    min_pallas_batch: batches smaller than this use the fused XLA path (launch /
      DMA setup overhead dwarfs the ~KFLOP of work there).
    compute_dtype: MXU operand dtype (bf16 default; accumulation is always f32).
    single_buffer_weights: use pl.Buffered(1) for the resident weight blocks
      (halves their VMEM footprint; only matters for v7x with large hidden_size).
    """
    w1, b1, w2, b2, w3, b3 = params
    squeeze = (x.ndim == 1)
    if squeeze:
        x = x[None, :]
    B, D = x.shape
    H = w1.shape[0]
    assert D == MAX_STATE_DIM

    if B < min_pallas_batch:
        out = _reference(x.astype(jnp.float32), params)
        return out[0] if squeeze else out

    # ---- batch tiling ------------------------------------------------------
    bt = max(128, (int(batch_tile) // 128) * 128)
    # Tiny-batch guard only: one 128-lane tile minimum (pad is ~free there).
    B_pad = B if B >= 128 else 128
    bt = min(bt, _round_up(B_pad, 128))
    # Keep >=2 grid steps for realistic batches so the "parallel" axis can
    # shard across v7x's two TensorCores.
    if B_pad >= 256:
        bt = min(bt, _round_up(pl.cdiv(B_pad, 2), 128))
    grid = (pl.cdiv(B_pad, bt),)

    # ---- operands (x stays in natural [B, D] layout: no transpose pass) -----
    x_c = x.astype(compute_dtype)          # callers can pass bf16 to skip this
    if B_pad != B:
        x_c = jnp.pad(x_c, ((0, B_pad - B), (0, 0)))
    w1_c = w1.astype(compute_dtype)
    w2_c = w2.astype(compute_dtype)
    b1_c = b1.reshape(H, 1).astype(jnp.float32)
    b2_c = b2.reshape(H, 1).astype(jnp.float32)
    w3_col = w3.reshape(H, 1).astype(jnp.float32)   # used on the VPU; keep f32
    b3_c = b3.reshape(1, 1).astype(jnp.float32)

    full = lambda i: (0, 0)   # resident weight/bias blocks

    def wspec(shape):
        if single_buffer_weights:
            # Constant index_map -> DMA'd once; a single buffer halves VMEM.
            return pl.BlockSpec(shape, full, pipeline_mode=pl.Buffered(1))
        return pl.BlockSpec(shape, full)

    esz = jnp.dtype(compute_dtype).itemsize
    cost = pl.CostEstimate(
        flops=2 * B_pad * (D * H + H * H + H),
        transcendentals=0,
        bytes_accessed=(B_pad * D * esz + B_pad * 4
                        + (H * D + H * H) * esz + (3 * H + 1) * 4),
    )

    # Only raise the scoped-VMEM limit when the footprint actually needs it
    # (v5e default is 16 MiB); small configs keep the compiler default.
    nbuf_w = 1 if single_buffer_weights else 2
    vmem_est = (2 * bt * D * esz + 2 * bt * 4
                + nbuf_w * (H * D + H * H) * esz
                + 2 * H * bt * 4 + 8 * H * 4)
    vmem_limit = None
    if vmem_est > 12 * 1024 * 1024:
        vmem_limit = int(min(60 * 1024 * 1024, max(32 * 1024 * 1024, 2 * vmem_est)))

    out = pl.pallas_call(
        _mlp_value_kernel,
        out_shape=jax.ShapeDtypeStruct((1, B_pad), jnp.float32),
        grid_spec=pltpu.PrefetchScalarGridSpec(
            num_scalar_prefetch=0,
            grid=grid,
            in_specs=[
                pl.BlockSpec((bt, D), lambda i: (i, 0)),            # x tile
                wspec((H, D)),                                      # W1
                wspec((H, 1)),                                      # b1 column
                wspec((H, H)),                                      # W2
                wspec((H, 1)),                                      # b2 column
                wspec((H, 1)),                                      # w3 column
                pl.BlockSpec(memory_space=pltpu.MemorySpace.SMEM),  # b3 scalar
            ],
            out_specs=pl.BlockSpec((1, bt), lambda i: (0, i)),      # lane-dense
        ),
        compiler_params=pltpu.CompilerParams(
            dimension_semantics=("parallel",),
            vmem_limit_bytes=vmem_limit,
        ),
        cost_estimate=cost,
    )(x_c, w1_c, b1_c, w2_c, b2_c, w3_col, b3_c)

    out = out[0, :B].reshape(B, 1)
    return out[0] if squeeze else out


def init_params(key, hidden_size):
    """Deterministic init; torch nn.Linear layout: W [out, in], b [out]."""
    k1, k2, k3, k4, k5, k6 = jax.random.split(key, 6)

    def lin(kw, kb, fan_in, fan_out):
        bound = 1.0 / jnp.sqrt(fan_in)
        w = jax.random.uniform(kw, (fan_out, fan_in), jnp.float32, -bound, bound)
        b = jax.random.uniform(kb, (fan_out,), jnp.float32, -bound, bound)
        return w, b

    w1, b1 = lin(k1, k2, MAX_STATE_DIM, hidden_size)
    w2, b2 = lin(k3, k4, hidden_size, hidden_size)
    w3, b3 = lin(k5, k6, hidden_size, 1)
    return (w1, b1, w2, b2, w3, b3)


if __name__ == "__main__":
    key = jax.random.PRNGKey(0)
    kx, kp = jax.random.split(key)

    hidden_size = 32
    params = init_params(kp, hidden_size)

    # Tolerance note: values are O(1); 5e-2 is immune to MXU bf16-pass /
    # matmul-precision differences while still catching any layout/bias bug.
    TOL = 5e-2

    # 1) Small batch, single 128-lane tile, default bf16 operands.
    batch = 16
    x = jax.random.normal(kx, (batch, MAX_STATE_DIM), dtype=jnp.float32)
    ref = _reference(x, params)
    out = unified_value_network(x, params, min_pallas_batch=0)
    out = jax.block_until_ready(out)
    assert out.shape == (batch, 1), out.shape
    assert jnp.allclose(out, ref, atol=TOL, rtol=TOL), "bf16 kernel mismatch vs reference"

    # 2) Same batch, f32 operands.
    out32 = unified_value_network(x, params, min_pallas_batch=0,
                                  compute_dtype=jnp.float32)
    out32 = jax.block_until_ready(out32)
    assert jnp.allclose(out32, ref, atol=TOL, rtol=TOL), "f32 kernel mismatch vs reference"

    # 3) Multi-step grid with a partial tail block (no wrapper-side padding).
    batch2 = 200
    x2 = jax.random.normal(kx, (batch2, MAX_STATE_DIM), dtype=jnp.float32)
    ref2 = _reference(x2, params)
    out2 = unified_value_network(x2, params, batch_tile=128, min_pallas_batch=0,
                                 compute_dtype=jnp.float32)
    out2 = jax.block_until_ready(out2)
    assert out2.shape == (batch2, 1), out2.shape
    assert jnp.allclose(out2, ref2, atol=TOL, rtol=TOL), "partial-block mismatch"

    print("KERNEL_OK")
</pallas_src>

<mosaic_0001>
module attributes {stable_mosaic.version = 11 : i64} {
  func.func @_mlp_value_kernel(%arg0: i32, %arg1: memref<128x6xbf16, #tpu.memory_space<vmem>>, %arg2: memref<32x6xbf16, #tpu.memory_space<vmem>>, %arg3: memref<32x1xf32, #tpu.memory_space<vmem>>, %arg4: memref<32x32xbf16, #tpu.memory_space<vmem>>, %arg5: memref<32x1xf32, #tpu.memory_space<vmem>>, %arg6: memref<32x1xf32, #tpu.memory_space<vmem>>, %arg7: memref<1x1xf32, #tpu.memory_space<smem>>, %arg8: memref<1x128xf32, #tpu.memory_space<vmem>>) attributes {dimension_semantics = [#tpu.dimension_semantics<parallel>], iteration_bounds = array<i64: 1>, scalar_prefetch = 0 : i64, scratch_operands = 0 : i64, tpu.core_type = #tpu.core_type<tc>, window_params = [{transform_indices = @transform_0, window_bounds = array<i64: 128, 6>}, {pipeline_mode = #tpu.pipeline_mode<synchronous>, transform_indices = @transform_1, window_bounds = array<i64: 32, 6>}, {pipeline_mode = #tpu.pipeline_mode<synchronous>, transform_indices = @transform_2, window_bounds = array<i64: 32, 1>}, {pipeline_mode = #tpu.pipeline_mode<synchronous>, transform_indices = @transform_3, window_bounds = array<i64: 32, 32>}, {pipeline_mode = #tpu.pipeline_mode<synchronous>, transform_indices = @transform_4, window_bounds = array<i64: 32, 1>}, {pipeline_mode = #tpu.pipeline_mode<synchronous>, transform_indices = @transform_5, window_bounds = array<i64: 32, 1>}, {transform_indices = @transform_6, window_bounds = array<i64: 1, 1>}, {transform_indices = @transform_7, window_bounds = array<i64: 1, 128>}]} {
    %c0 = arith.constant 0 : index
    %c0_0 = arith.constant 0 : index
    %0 = vector.load %arg2[%c0, %c0_0] : memref<32x6xbf16, #tpu.memory_space<vmem>>, vector<32x6xbf16>
    %c0_1 = arith.constant 0 : index
    %c0_2 = arith.constant 0 : index
    %1 = vector.load %arg1[%c0_1, %c0_2] : memref<128x6xbf16, #tpu.memory_space<vmem>>, vector<128x6xbf16>
    %cst = arith.constant dense<0.000000e+00> : vector<32x128xf32>
    %2 = tpu.matmul %0, %1, %cst {dimension_numbers = #tpu.dot_dimension_numbers<[1], [1], [0], [0], [0, 0, 1, 0], [], []>} : vector<32x6xbf16>, vector<128x6xbf16>, vector<32x128xf32> -> vector<32x128xf32>
    %c0_3 = arith.constant 0 : index
    %c0_4 = arith.constant 0 : index
    %3 = vector.load %arg3[%c0_3, %c0_4] : memref<32x1xf32, #tpu.memory_space<vmem>>, vector<32x1xf32>
    %4 = vector.broadcast %3 : vector<32x1xf32> to vector<32x128xf32>
    %5 = arith.addf %2, %4 : vector<32x128xf32>
    %cst_5 = arith.constant 0.000000e+00 : f32
    %6 = vector.broadcast %cst_5 : f32 to vector<32x128xf32>
    %7 = arith.maximumf %5, %6 : vector<32x128xf32>
    %c0_6 = arith.constant 0 : index
    %c0_7 = arith.constant 0 : index
    %8 = vector.load %arg4[%c0_6, %c0_7] : memref<32x32xbf16, #tpu.memory_space<vmem>>, vector<32x32xbf16>
    %9 = arith.truncf %7 : vector<32x128xf32> to vector<32x128xbf16>
    %cst_8 = arith.constant dense<0.000000e+00> : vector<32x128xf32>
    %10 = tpu.matmul %8, %9, %cst_8 {dimension_numbers = #tpu.dot_dimension_numbers<[1], [0], [0], [1], [0, 0, 1, 1], [], []>} : vector<32x32xbf16>, vector<32x128xbf16>, vector<32x128xf32> -> vector<32x128xf32>
    %c0_9 = arith.constant 0 : index
    %c0_10 = arith.constant 0 : index
    %11 = vector.load %arg5[%c0_9, %c0_10] : memref<32x1xf32, #tpu.memory_space<vmem>>, vector<32x1xf32>
    %12 = vector.broadcast %11 : vector<32x1xf32> to vector<32x128xf32>
    %13 = arith.addf %10, %12 : vector<32x128xf32>
    %cst_11 = arith.constant 0.000000e+00 : f32
    %14 = vector.broadcast %cst_11 : f32 to vector<32x128xf32>
    %15 = arith.maximumf %13, %14 : vector<32x128xf32>
    %c0_12 = arith.constant 0 : index
    %c0_13 = arith.constant 0 : index
    %16 = vector.load %arg6[%c0_12, %c0_13] : memref<32x1xf32, #tpu.memory_space<vmem>>, vector<32x1xf32>
    %17 = vector.broadcast %16 : vector<32x1xf32> to vector<32x128xf32>
    %18 = arith.mulf %17, %15 : vector<32x128xf32>
    %cst_14 = arith.constant dense<0.000000e+00> : vector<128xf32>
    %19 = vector.multi_reduction <add>, %18, %cst_14 [0] : vector<32x128xf32> to vector<128xf32>
    %20 = vector.shape_cast %19 : vector<128xf32> to vector<1x128xf32>
    %c0_15 = arith.constant 0 : index
    %c0_16 = arith.constant 0 : index
    %21 = memref.load %arg7[%c0_15, %c0_16] : memref<1x1xf32, #tpu.memory_space<smem>>
    %22 = vector.broadcast %21 : f32 to vector<1x128xf32>
    %23 = arith.addf %20, %22 : vector<1x128xf32>
    %c0_17 = arith.constant 0 : index
    %c0_18 = arith.constant 0 : index
    %24 = vector.load %arg8[%c0_17, %c0_18] : memref<1x128xf32, #tpu.memory_space<vmem>>, vector<1x128xf32>
    tpu.vector_store %arg8[%c0_17, %c0_18], %23 {strides = array<i32>} : memref<1x128xf32, #tpu.memory_space<vmem>>, vector<1x128xf32>,
    return
  }
  func.func @transform_0(%arg0: i32) -> (i32, i32) {
    %c0_i32 = arith.constant 0 : i32
    %c0_i32_0 = arith.constant 0 : i32
    return %arg0, %c0_i32 : i32, i32
  }
  func.func @transform_1(%arg0: i32) -> (i32, i32) {
    %c0_i32 = arith.constant 0 : i32
    %c0_i32_0 = arith.constant 0 : i32
    %c0_i32_1 = arith.constant 0 : i32
    return %c0_i32, %c0_i32_0 : i32, i32
  }
  func.func @transform_2(%arg0: i32) -> (i32, i32) {
    %c0_i32 = arith.constant 0 : i32
    %c0_i32_0 = arith.constant 0 : i32
    %c0_i32_1 = arith.constant 0 : i32
    return %c0_i32, %c0_i32_0 : i32, i32
  }
  func.func @transform_3(%arg0: i32) -> (i32, i32) {
    %c0_i32 = arith.constant 0 : i32
    %c0_i32_0 = arith.constant 0 : i32
    %c0_i32_1 = arith.constant 0 : i32
    return %c0_i32, %c0_i32_0 : i32, i32
  }
  func.func @transform_4(%arg0: i32) -> (i32, i32) {
    %c0_i32 = arith.constant 0 : i32
    %c0_i32_0 = arith.constant 0 : i32
    %c0_i32_1 = arith.constant 0 : i32
    return %c0_i32, %c0_i32_0 : i32, i32
  }
  func.func @transform_5(%arg0: i32) -> (i32, i32) {
    %c0_i32 = arith.constant 0 : i32
    %c0_i32_0 = arith.constant 0 : i32
    %c0_i32_1 = arith.constant 0 : i32
    return %c0_i32, %c0_i32_0 : i32, i32
  }
  func.func @transform_6(%arg0: i32) -> (i32, i32) {
    %c0_i32 = arith.constant 0 : i32
    %c0_i32_0 = arith.constant 0 : i32
    %c0_i32_1 = arith.constant 0 : i32
    return %c0_i32, %c0_i32_0 : i32, i32
  }
  func.func @transform_7(%arg0: i32) -> (i32, i32) {
    %c0_i32 = arith.constant 0 : i32
    %c0_i32_0 = arith.constant 0 : i32
    return %c0_i32, %arg0 : i32, i32
  }
}

</mosaic_0001>

<llo_original>
// kernel: tpu_custom_call.1
$region0: #{tpu_custom_call.1}
  #allocation0 [shape = 'u32[]', space=smem, size = 0x4, offset = 0x4, fixed_abs, tag = 'smem constant byte address 0x4 - core index']
  #allocation1 [shape = 'u32[144,128]{1,0:T(1,128)}', space=vmem, size = 0x12000, scoped, tag = 'internal scratch']
  #allocation2 [shape = 'f32[1,1]{1,0:T(1,128)S(6)}', space=smem, size = 0x200, scoped, tag = 'scoped memory for tpu_custom_call.1']
  %s0 = inlined_call_operand.vmem [shape: bf16[128,6], index: 0, kind: input, shape index: {}]
  %s1 = inlined_call_operand.vmem [shape: bf16[32,6], index: 1, kind: input, shape index: {}]
  %s2 = inlined_call_operand.vmem [shape: f32[32,1], index: 2, kind: input, shape index: {}]
  %s3 = inlined_call_operand.vmem [shape: bf16[32,32], index: 3, kind: input, shape index: {}]
  %s4 = inlined_call_operand.vmem [shape: f32[32,1], index: 4, kind: input, shape index: {}]
  %s5 = inlined_call_operand.vmem [shape: f32[32,1], index: 5, kind: input, shape index: {}]
  %s6 = inlined_call_operand.<no memory space> [shape: f32[1,1], index: 6, kind: input, shape index: {}]
  %s7 = inlined_call_operand.hbm [shape: f32[1,128], index: 7, kind: output, shape index: {}]
  %s8 = sld [smem:[#allocation0]]
  $region38: #{tpu_custom_call.1} parent=0
    _
  %s10 = ssub.s32 1, %s8
  %s11 = scalar_select 0, %s10, %s8
  %12 = sst [smem:[#allocation2]] %s6
  $region1: #{tpu_custom_call.1} parent=0
    #allocation3 [shape = 'u8[512]{0}', space=vmem, size = 0x400, scoped, tag = 'output window, operand 0, single buffered']
    #allocation4 [shape = 's32[1]{0}', space=sflag, size = 0x4, scoped, tag = 'scoped memory for tpu_custom_call.1']
    %13 = vsyncpa [#allocation4], 0
    // Predicated region
    $region2: #{tpu_custom_call.1} parent=1 // pred_check
      _
    $region3: #{tpu_custom_call.1} parent=1 // pred_check_branch
      %15 = sbr.rel (0) target = $region5
    $region4: #{tpu_custom_call.1} parent=1 // pred_region
      _
    $region5: #{tpu_custom_call.1} parent=1 // pred_fallthru
      _
    // Predicated region
    $region6: #{tpu_custom_call.1} parent=1 // pred_check
      _
    $region7: #{tpu_custom_call.1} parent=1 // pred_check_branch
      %17 = sbr.rel (0) target = $region9
    $region8: #{tpu_custom_call.1} parent=1 // pred_region
      _
    $region9: #{tpu_custom_call.1} parent=1 // pred_fallthru
      _
    // Predicated region
    $region10: #{tpu_custom_call.1} parent=1 // pred_check
      _
    $region11: #{tpu_custom_call.1} parent=1 // pred_check_branch
      %19 = sbr.rel (0) target = $region13
    $region12: #{tpu_custom_call.1} parent=1 // pred_region
      _
    $region13: #{tpu_custom_call.1} parent=1 // pred_fallthru
      _
    // Predicated region
    $region14: #{tpu_custom_call.1} parent=1 // pred_check
      _
    $region15: #{tpu_custom_call.1} parent=1 // pred_check_branch
      %21 = sbr.rel (0) target = $region17
    $region16: #{tpu_custom_call.1} parent=1 // pred_region
      _
    $region17: #{tpu_custom_call.1} parent=1 // pred_fallthru
      _
    // Predicated region
    $region18: #{tpu_custom_call.1} parent=1 // pred_check
      _
    $region19: #{tpu_custom_call.1} parent=1 // pred_check_branch
      %23 = sbr.rel (0) target = $region21
    $region20: #{tpu_custom_call.1} parent=1 // pred_region
      _
    $region21: #{tpu_custom_call.1} parent=1 // pred_fallthru
      _
    // Predicated region
    $region22: #{tpu_custom_call.1} parent=1 // pred_check
      _
    $region23: #{tpu_custom_call.1} parent=1 // pred_check_branch
      %25 = sbr.rel (0) target = $region25
    $region24: #{tpu_custom_call.1} parent=1 // pred_region
      _
    $region25: #{tpu_custom_call.1} parent=1 // pred_fallthru
      _
    // Predicated region
    $region26: #{tpu_custom_call.1} parent=1 // pred_check
      _
    $region27: #{tpu_custom_call.1} parent=1 // pred_check_branch
      %27 = sbr.rel (0) target = $region29
    $region28: #{tpu_custom_call.1} parent=1 // pred_region
      _
    $region29: #{tpu_custom_call.1} parent=1 // pred_fallthru
      _
    %v29 = vld [vmem:[%s1] sm:$0xf]
    %v30 = vld [vmem:[%s1 + $0x4] sm:$0xf]
    %v31 = vld [vmem:[%s1 + $0x8] sm:$0xf]
    %v32 = vld [vmem:[%s1 + $0xc] sm:$0xf]
    %v33 = vld [vmem:[%s0] sm:$0xf]
    %v34 = vld [vmem:[%s0 + $0x4] sm:$0xf]
    %v35 = vld [vmem:[%s0 + $0x8] sm:$0xf]
    %v36 = vld [vmem:[%s0 + $0xc] sm:$0xf]
    %v37 = vld [vmem:[%s0 + $0x10] sm:$0xf]
    %v38 = vld [vmem:[%s0 + $0x14] sm:$0xf]
    %v39 = vld [vmem:[%s0 + $0x18] sm:$0xf]
    %v40 = vld [vmem:[%s0 + $0x1c] sm:$0xf]
    %v41 = vld [vmem:[%s0 + $0x20] sm:$0xf]
    %v42 = vld [vmem:[%s0 + $0x24] sm:$0xf]
    %v43 = vld [vmem:[%s0 + $0x28] sm:$0xf]
    %v44 = vld [vmem:[%s0 + $0x2c] sm:$0xf]
    %v45 = vld [vmem:[%s0 + $0x30] sm:$0xf]
    %v46 = vld [vmem:[%s0 + $0x34] sm:$0xf]
    %v47 = vld [vmem:[%s0 + $0x38] sm:$0xf]
    %v48 = vld [vmem:[%s0 + $0x3c] sm:$0xf]
    %v49 = vld [vmem:[%s2] sm:$0xff]
    %v50 = vld [vmem:[%s2 + $0x8] sm:$0xff]
    %v51 = vld [vmem:[%s2 + $0x10] sm:$0xff]
    %v52 = vld [vmem:[%s2 + $0x18] sm:$0xff]
    %54 = vset.pattern.permute.xlu0 0
    %55 = vperm.xlu0 %54, %v49
    %v56 = vpop.permute.xlu0 %55
    %59 = vset.pattern.permute.xlu0 0
    %60 = vperm.xlu0 %59, %v50
    %v61 = vpop.permute.xlu0 %60
    %64 = vset.pattern.permute.xlu0 0
    %65 = vperm.xlu0 %64, %v51
    %v66 = vpop.permute.xlu0 %65
    %69 = vset.pattern.permute.xlu0 0
    %70 = vperm.xlu0 %69, %v52
    %v71 = vpop.permute.xlu0 %70
    %v77 = vunpack.c.l.b16 %v29
    %v78 = vunpack.c.l.b16 %v30
    %v79 = vunpack.c.l.b16 %v31
    %v80 = vunpack.c.l.b16 %v32
    %v81 = vpack.c.b16 %v78, %v77
    %v82 = vpack.c.b16 %v80, %v79
    %v99 = vunpack.c.l.b16 %v33
    %v100 = vunpack.c.l.b16 %v34
    %v101 = vunpack.c.l.b16 %v35
    %v102 = vunpack.c.l.b16 %v36
    %v103 = vunpack.c.l.b16 %v37
    %v104 = vunpack.c.l.b16 %v38
    %v105 = vunpack.c.l.b16 %v39
    %v106 = vunpack.c.l.b16 %v40
    %v107 = vunpack.c.l.b16 %v41
    %v108 = vunpack.c.l.b16 %v42
    %v109 = vunpack.c.l.b16 %v43
    %v110 = vunpack.c.l.b16 %v44
    %v111 = vunpack.c.l.b16 %v45
    %v112 = vunpack.c.l.b16 %v46
    %v113 = vunpack.c.l.b16 %v47
    %v114 = vunpack.c.l.b16 %v48
    %v115 = vpack.c.b16 %v100, %v99
    %v116 = vpack.c.b16 %v102, %v101
    %v117 = vpack.c.b16 %v104, %v103
    %v118 = vpack.c.b16 %v106, %v105
    %v119 = vpack.c.b16 %v108, %v107
    %v120 = vpack.c.b16 %v110, %v109
    %v121 = vpack.c.b16 %v112, %v111
    %v122 = vpack.c.b16 %v114, %v113
    %vm123 = vcmask 48128
    %v125 = vsel %vm123, %v81, 0
    %v128 = vsel %vm123, %v82, 0
    %v131 = vsel %vm123, %v115, 0
    %v134 = vsel %vm123, %v116, 0
    %v137 = vsel %vm123, %v117, 0
    %v140 = vsel %vm123, %v118, 0
    %v143 = vsel %vm123, %v119, 0
    %v146 = vsel %vm123, %v120, 0
    %v149 = vsel %vm123, %v121, 0
    %v152 = vsel %vm123, %v122, 0
    %154 = vmatprep.subr.bf16.mxu0 0
    %155 = vmatpush1.bf16.xpose.msra.mxu0 %v131
    %156 = vmatprep.subr.bf16.mxu0 0
    %157 = vmatpush1.bf16.xpose.msra.mxu0 %v134
    %158 = vmatprep.subr.bf16.mxu0 0
    %159 = vmatpush1.bf16.xpose.msra.mxu0 %v137
    %160 = vmatprep.subr.bf16.mxu0 0
    %161 = vmatpush1.bf16.xpose.msra.mxu0 %v140
    %162 = vmatprep.subr.bf16.mxu0 0
    %163 = vmatpush1.bf16.xpose.msra.mxu0 %v143
    %164 = vmatprep.subr.bf16.mxu0 0
    %165 = vmatpush1.bf16.xpose.msra.mxu0 %v146
    %166 = vmatprep.subr.bf16.mxu0 0
    %167 = vmatpush1.bf16.xpose.msra.mxu0 %v149
    %168 = vmatprep.subr.bf16.mxu0 0
    %169 = vmatpush1.bf16.xpose.msra.mxu0 %v152
    %170 = vmatprep.subr.bf16.mxu0 0
    %171 = vmatpush1.bf16.xpose.msra.mxu0 0
    %172 = vmatprep.subr.bf16.mxu0 0
    %173 = vmatpush1.bf16.xpose.msra.mxu0 0
    %174 = vmatprep.subr.bf16.mxu0 0
    %175 = vmatpush1.bf16.xpose.msra.mxu0 0
    %176 = vmatprep.subr.bf16.mxu0 0
    %177 = vmatpush1.bf16.xpose.msra.mxu0 0
    %178 = vmatprep.subr.bf16.mxu0 0
    %179 = vmatpush1.bf16.xpose.msra.mxu0 0
    %180 = vmatprep.subr.bf16.mxu0 0
    %181 = vmatpush1.bf16.xpose.msra.mxu0 0
    %182 = vmatprep.subr.bf16.mxu0 0
    %183 = vmatpush1.bf16.xpose.msra.mxu0 0
    %184 = vmatprep.subr.bf16.mxu0 0
    %185 = vmatpush1.bf16.xpose.msra.mxu0 0
    %186 = vmatprep.mubr.bf16.mxu0 0
    %187 = vmatmul.mubr.bf16.gmra.mrb[0].mxu0 %v125
    %v188 = vpop.f32.mrb[0].mxu0
    %v189 = vadd.f32 %v56, %v188
    %v190 = vpop.f32.mrb[0].mxu0
    %v191 = vpop.f32.mrb[0].mxu0
    %v192 = vadd.f32 %v61, %v191
    %v193 = vpop.f32.mrb[0].mxu0
    %194 = vmatprep.mubr.bf16.mxu0 0
    %195 = vmatmul.mubr.bf16.gmra.mrb[0].mxu0 %v128
    %v196 = vpop.f32.mrb[0].mxu0
    %v197 = vadd.f32 %v66, %v196
    %v198 = vpop.f32.mrb[0].mxu0
    %v199 = vpop.f32.mrb[0].mxu0
    %v200 = vadd.f32 %v71, %v199
    %v201 = vpop.f32.mrb[0].mxu0
    %202 = vdwg.mxu0
    %v203 = vmax.f32 %v189, 0.0
    %v204 = vmax.f32 %v192, 0.0
    %v205 = vmax.f32 %v197, 0.0
    %v206 = vmax.f32 %v200, 0.0
    %v207 = vld [vmem:[%s3] sm:$0xf]
    %v208 = vld [vmem:[%s3 + $0x4] sm:$0xf]
    %v209 = vld [vmem:[%s3 + $0x8] sm:$0xf]
    %v210 = vld [vmem:[%s3 + $0xc] sm:$0xf]
    %v211 = vpack.c.bf16 %v204, %v203
    %v212 = vpack.c.bf16 %v206, %v205
    %v213 = vld [vmem:[%s4] sm:$0xff]
    %v214 = vld [vmem:[%s4 + $0x8] sm:$0xff]
    %v215 = vld [vmem:[%s4 + $0x10] sm:$0xff]
    %v216 = vld [vmem:[%s4 + $0x18] sm:$0xff]
    %218 = vset.pattern.permute.xlu0 0
    %219 = vperm.xlu0 %218, %v213
    %v220 = vpop.permute.xlu0 %219
    %223 = vset.pattern.permute.xlu0 0
    %224 = vperm.xlu0 %223, %v214
    %v225 = vpop.permute.xlu0 %224
    %228 = vset.pattern.permute.xlu0 0
    %229 = vperm.xlu0 %228, %v215
    %v230 = vpop.permute.xlu0 %229
    %233 = vset.pattern.permute.xlu0 0
    %234 = vperm.xlu0 %233, %v216
    %v235 = vpop.permute.xlu0 %234
    %v241 = vunpack.c.l.b16 %v207
    %v242 = vunpack.c.l.b16 %v208
    %v243 = vunpack.c.l.b16 %v209
    %v244 = vunpack.c.l.b16 %v210
    %v245 = vpack.c.b16 %v242, %v241
    %v246 = vpack.c.b16 %v244, %v243
    %vm247 = vcmask 261120
    %v249 = vsel %vm247, %v245, 0
    %v252 = vsel %vm247, %v246, 0
    %254 = vmatprep.subr.bf16.mxu0 0
    %255 = vmatpush1.bf16.msra.mxu0 %v211
    %256 = vmatprep.subr.bf16.mxu0 0
    %257 = vmatpush1.bf16.msra.mxu0 %v212
    %258 = vmatprep.subr.bf16.mxu0 0
    %259 = vmatpush1.bf16.msra.mxu0 0
    %260 = vmatprep.subr.bf16.mxu0 0
    %261 = vmatpush1.bf16.msra.mxu0 0
    %262 = vmatprep.subr.bf16.mxu0 0
    %263 = vmatpush1.bf16.msra.mxu0 0
    %264 = vmatprep.subr.bf16.mxu0 0
    %265 = vmatpush1.bf16.msra.mxu0 0
    %266 = vmatprep.subr.bf16.mxu0 0
    %267 = vmatpush1.bf16.msra.mxu0 0
    %268 = vmatprep.subr.bf16.mxu0 0
    %269 = vmatpush1.bf16.msra.mxu0 0
    %270 = vmatprep.subr.bf16.mxu0 0
    %271 = vmatpush1.bf16.msra.mxu0 0
    %272 = vmatprep.subr.bf16.mxu0 0
    %273 = vmatpush1.bf16.msra.mxu0 0
    %274 = vmatprep.subr.bf16.mxu0 0
    %275 = vmatpush1.bf16.msra.mxu0 0
    %276 = vmatprep.subr.bf16.mxu0 0
    %277 = vmatpush1.bf16.msra.mxu0 0
    %278 = vmatprep.subr.bf16.mxu0 0
    %279 = vmatpush1.bf16.msra.mxu0 0
    %280 = vmatprep.subr.bf16.mxu0 0
    %281 = vmatpush1.bf16.msra.mxu0 0
    %282 = vmatprep.subr.bf16.mxu0 0
    %283 = vmatpush1.bf16.msra.mxu0 0
    %284 = vmatprep.subr.bf16.mxu0 0
    %285 = vmatpush1.bf16.msra.mxu0 0
    %286 = vmatprep.mubr.bf16.mxu0 0
    %287 = vmatmul.mubr.bf16.gmra.mrb[0].mxu0 %v249
    %v288 = vpop.f32.mrb[0].mxu0
    %v289 = vadd.f32 %v220, %v288
    %v290 = vpop.f32.mrb[0].mxu0
    %v291 = vpop.f32.mrb[0].mxu0
    %v292 = vadd.f32 %v225, %v291
    %v293 = vpop.f32.mrb[0].mxu0
    %294 = vmatprep.mubr.bf16.mxu0 0
    %295 = vmatmul.mubr.bf16.gmra.mrb[0].mxu0 %v252
    %v296 = vpop.f32.mrb[0].mxu0
    %v297 = vadd.f32 %v230, %v296
    %v298 = vpop.f32.mrb[0].mxu0
    %v299 = vpop.f32.mrb[0].mxu0
    %v300 = vadd.f32 %v235, %v299
    %v301 = vpop.f32.mrb[0].mxu0
    %302 = vdwg.mxu0
    %v303 = vmax.f32 %v289, 0.0
    %v304 = vmax.f32 %v292, 0.0
    %v305 = vmax.f32 %v297, 0.0
    %v306 = vmax.f32 %v300, 0.0
    %v307 = vld [vmem:[%s5] sm:$0xff]
    %v308 = vld [vmem:[%s5 + $0x8] sm:$0xff]
    %v309 = vld [vmem:[%s5 + $0x10] sm:$0xff]
    %v310 = vld [vmem:[%s5 + $0x18] sm:$0xff]
    %312 = vset.pattern.permute.xlu0 0
    %313 = vperm.xlu0 %312, %v307
    %v314 = vpop.permute.xlu0 %313
    %317 = vset.pattern.permute.xlu0 0
    %318 = vperm.xlu0 %317, %v308
    %v319 = vpop.permute.xlu0 %318
    %322 = vset.pattern.permute.xlu0 0
    %323 = vperm.xlu0 %322, %v309
    %v324 = vpop.permute.xlu0 %323
    %327 = vset.pattern.permute.xlu0 0
    %328 = vperm.xlu0 %327, %v310
    %v329 = vpop.permute.xlu0 %328
    %v331 = vmul.f32 %v314, %v303
    %v332 = vmul.f32 %v319, %v304
    %v333 = vmul.f32 %v324, %v305
    %v334 = vmul.f32 %v329, %v306
    %v335 = vadd.f32 %v331, %v332
    %v336 = vadd.f32 %v335, %v333
    %v337 = vadd.f32 %v336, %v334
    %v338 = vrot.slane %v337, 4
    %v339 = vadd.f32 %v337, %v338
    %v340 = vrot.slane %v339, 2
    %v341 = vadd.f32 %v339, %v340
    %v342 = vrot.slane %v341, 1
    %v343 = vadd.f32 %v341, %v342
    %s344 = sld [smem:[#allocation2]]
    %v345 = vstv %s344
    %v346 = vadd.f32 %v343, %v345
    %347 = vst [vmem:[#allocation3] sm:$0x1] %v346
    // Predicated region
    $region30: #{tpu_custom_call.1} parent=1 // pred_check
      _
    $region31: #{tpu_custom_call.1} parent=1 // pred_check_branch
      %349 = sbr.rel (0) target = $region33
    $region32: #{tpu_custom_call.1} parent=1 // pred_region
      %s351 = ssub.s32 16, 16
      %352 = vsyncadd [#allocation4], %s351
      %s354 = sshll.u32 [#allocation3], 4
      %s355 = int_to_ptr.vmem [resolvable:$true] %s354
      %357 = dma.vmem_to_hbm [thread:$0]  %s355, 16, %s7, [#allocation4]
    $region33: #{tpu_custom_call.1} parent=1 // pred_fallthru
      _
    // Predicated region
    $region34: #{tpu_custom_call.1} parent=1 // pred_check
      _
    $region35: #{tpu_custom_call.1} parent=1 // pred_check_branch
      %359 = sbr.rel (0) target = $region37
    $region36: #{tpu_custom_call.1} parent=1 // pred_region
      %360 = dma.done [#allocation4], 16
    $region37: #{tpu_custom_call.1} parent=1 // pred_fallthru
      _
    %361 = vsyncpa [#allocation4], 1

</llo_original>
